<compile_context>
chip_gen: v5e
topology: v5e:2x2
jax: 0.10.0
libtpu: 0.0.40
codegen_flags: <defaults>
</compile_context>

<pallas_src>
import jax
import jax.numpy as jnp
from jax.experimental import pallas as pl
from jax.experimental.pallas import tpu as pltpu


def _mlp_kernel(xt_ref, w1_ref, b1_ref, w2_ref, b2_ref, w3_ref, b3_ref, o_ref):
    """Fused 3-layer MLP forward on one batch tile (transposed layout)."""
    xt = xt_ref[...]                                           # (F, TB) f32

    # layer1 + ReLU: (64, F) @ (F, TB) -> (64, TB)
    h1 = jnp.dot(w1_ref[...], xt, preferred_element_type=jnp.float32)
    h1 = jnp.maximum(h1 + b1_ref[...], 0.0)

    # dropout(0.1) -> identity in eval mode

    # layer2 + ReLU: (32, 64) @ (64, TB) -> (32, TB)
    h2 = jnp.dot(w2_ref[...], h1, preferred_element_type=jnp.float32)
    h2 = jnp.maximum(h2 + b2_ref[...], 0.0)

    # dropout(0.1) -> identity in eval mode

    # layer3 + Sigmoid: VPU multiply + sublane (XLU) reduce, avoids an
    # M=1 MXU matmul.  w3 is (32, 1), broadcast along lanes.
    h3 = jnp.sum(h2 * w3_ref[...], axis=0, keepdims=True) + b3_ref[...]
    o_ref[...] = jax.nn.sigmoid(h3).astype(o_ref.dtype)        # (1, TB)


def titanic_forward(x, params, *, tb=4096):
    """x: (B, F) float32.  params: PyTorch-layout weights/biases.

    Returns (B, 1) float32 probabilities.
    """
    B, F = x.shape

    # Kernel-layout parameter views (all tiny, prepared once at trace time).
    w1 = params["w1"]                 # (64, F)   PyTorch (out, in) layout
    b1 = params["b1"][:, None]        # (64, 1)
    w2 = params["w2"]                 # (32, 64)
    b2 = params["b2"][:, None]        # (32, 1)
    w3 = params["w3"].T               # (32, 1)   column vector for VPU reduce
    b3 = params["b3"][:, None]        # (1, 1)

    # Batch tiling: TB multiple of 128 (lane dim); pad B up to a multiple.
    tb = min(tb, pl.cdiv(B, 128) * 128)
    assert tb % 128 == 0
    b_pad = pl.cdiv(B, tb) * tb
    num_tiles = b_pad // tb

    # Layout plumbing: present x as (F, B_pad) so batch maps to lanes.
    xt = jnp.pad(x.T, ((0, 0), (0, b_pad - B)))

    # Weights/biases: full-array blocks with a constant index_map so they are
    # DMA'd once and stay VMEM-resident across all grid steps.
    const = lambda a: pl.BlockSpec(a.shape, lambda i, n=a.ndim: (0,) * n)

    out = pl.pallas_call(
        _mlp_kernel,
        out_shape=jax.ShapeDtypeStruct((1, b_pad), jnp.float32),
        grid=(num_tiles,),
        in_specs=[
            pl.BlockSpec((F, tb), lambda i: (0, i)),   # x tile, pipelined
            const(w1), const(b1),
            const(w2), const(b2),
            const(w3), const(b3),
        ],
        out_specs=pl.BlockSpec((1, tb), lambda i: (0, i)),      # lane-dense
        compiler_params=pltpu.CompilerParams(
            dimension_semantics=("parallel",),        # megacore on v7x
            vmem_limit_bytes=32 * 1024 * 1024,
        ),
    )(xt, w1, b1, w2, b2, w3, b3)

    return out[:, :B].T                               # (B, 1)


def init_params(key, num_features):
    """Deterministic parameter init in PyTorch nn.Linear layout (out, in)."""
    ks = jax.random.split(key, 6)

    def linear(kw, kb, fan_in, fan_out):
        bound = 1.0 / jnp.sqrt(jnp.float32(fan_in))
        w = jax.random.uniform(kw, (fan_out, fan_in), jnp.float32, -bound, bound)
        b = jax.random.uniform(kb, (fan_out,), jnp.float32, -bound, bound)
        return w, b

    w1, b1 = linear(ks[0], ks[1], num_features, 64)
    w2, b2 = linear(ks[2], ks[3], 64, 32)
    w3, b3 = linear(ks[4], ks[5], 32, 1)
    return {"w1": w1, "b1": b1, "w2": w2, "b2": b2, "w3": w3, "b3": b3}


def reference_forward(x, p):
    """Pure-JAX reference (PyTorch semantics: y = x @ W.T + b)."""
    h = jnp.maximum(x @ p["w1"].T + p["b1"], 0.0)
    h = jnp.maximum(h @ p["w2"].T + p["b2"], 0.0)
    return jax.nn.sigmoid(h @ p["w3"].T + p["b3"])


if __name__ == "__main__":
    key = jax.random.PRNGKey(0)
    k_params, k_x1, k_x2 = jax.random.split(key, 3)

    num_features = 8      # e.g. Titanic tabular features after preprocessing
    params = init_params(k_params, num_features)

    # Small toy batch (single 128-row tile after padding).
    x_small = jax.random.normal(k_x1, (8, num_features), dtype=jnp.float32)
    y_small = jax.block_until_ready(titanic_forward(x_small, params))
    assert y_small.shape == (8, 1)
    assert jnp.allclose(y_small, reference_forward(x_small, params),
                        atol=1e-4, rtol=1e-4), "mismatch vs reference (small)"

    # Larger, non-tile-multiple batch: exercises the batch grid, tail padding,
    # VMEM-resident weights across steps, and the parallel axis on v7x.
    x_big = jax.random.normal(k_x2, (937, num_features), dtype=jnp.float32)
    y_big = jax.block_until_ready(titanic_forward(x_big, params, tb=256))
    assert y_big.shape == (937, 1)
    assert jnp.allclose(y_big, reference_forward(x_big, params),
                        atol=1e-4, rtol=1e-4), "mismatch vs reference (big)"

    print("KERNEL_OK")
</pallas_src>

<mosaic_0001>
module attributes {stable_mosaic.version = 11 : i64} {
  func.func @_mlp_kernel(%arg0: i32, %arg1: memref<8x128xf32, #tpu.memory_space<vmem>>, %arg2: memref<64x8xf32, #tpu.memory_space<vmem>>, %arg3: memref<64x1xf32, #tpu.memory_space<vmem>>, %arg4: memref<32x64xf32, #tpu.memory_space<vmem>>, %arg5: memref<32x1xf32, #tpu.memory_space<vmem>>, %arg6: memref<32x1xf32, #tpu.memory_space<vmem>>, %arg7: memref<1x1xf32, #tpu.memory_space<vmem>>, %arg8: memref<1x128xf32, #tpu.memory_space<vmem>>) attributes {dimension_semantics = [#tpu.dimension_semantics<parallel>], iteration_bounds = array<i64: 1>, scalar_prefetch = 0 : i64, scratch_operands = 0 : i64, tpu.core_type = #tpu.core_type<tc>, window_params = [{transform_indices = @transform_0, window_bounds = array<i64: 8, 128>}, {pipeline_mode = #tpu.pipeline_mode<synchronous>, transform_indices = @transform_1, window_bounds = array<i64: 64, 8>}, {pipeline_mode = #tpu.pipeline_mode<synchronous>, transform_indices = @transform_2, window_bounds = array<i64: 64, 1>}, {pipeline_mode = #tpu.pipeline_mode<synchronous>, transform_indices = @transform_3, window_bounds = array<i64: 32, 64>}, {pipeline_mode = #tpu.pipeline_mode<synchronous>, transform_indices = @transform_4, window_bounds = array<i64: 32, 1>}, {pipeline_mode = #tpu.pipeline_mode<synchronous>, transform_indices = @transform_5, window_bounds = array<i64: 32, 1>}, {pipeline_mode = #tpu.pipeline_mode<synchronous>, transform_indices = @transform_6, window_bounds = array<i64: 1, 1>}, {transform_indices = @transform_7, window_bounds = array<i64: 1, 128>}]} {
    %c0 = arith.constant 0 : index
    %c0_0 = arith.constant 0 : index
    %0 = vector.load %arg1[%c0, %c0_0] : memref<8x128xf32, #tpu.memory_space<vmem>>, vector<8x128xf32>
    %c0_1 = arith.constant 0 : index
    %c0_2 = arith.constant 0 : index
    %1 = vector.load %arg2[%c0_1, %c0_2] : memref<64x8xf32, #tpu.memory_space<vmem>>, vector<64x8xf32>
    %cst = arith.constant dense<0.000000e+00> : vector<64x128xf32>
    %2 = tpu.matmul %1, %0, %cst {dimension_numbers = #tpu.dot_dimension_numbers<[1], [0], [0], [1], [0, 0, 1, 1], [], []>} : vector<64x8xf32>, vector<8x128xf32>, vector<64x128xf32> -> vector<64x128xf32>
    %c0_3 = arith.constant 0 : index
    %c0_4 = arith.constant 0 : index
    %3 = vector.load %arg3[%c0_3, %c0_4] : memref<64x1xf32, #tpu.memory_space<vmem>>, vector<64x1xf32>
    %4 = vector.broadcast %3 : vector<64x1xf32> to vector<64x128xf32>
    %5 = arith.addf %2, %4 : vector<64x128xf32>
    %cst_5 = arith.constant 0.000000e+00 : f32
    %6 = vector.broadcast %cst_5 : f32 to vector<64x128xf32>
    %7 = arith.maximumf %5, %6 : vector<64x128xf32>
    %c0_6 = arith.constant 0 : index
    %c0_7 = arith.constant 0 : index
    %8 = vector.load %arg4[%c0_6, %c0_7] : memref<32x64xf32, #tpu.memory_space<vmem>>, vector<32x64xf32>
    %cst_8 = arith.constant dense<0.000000e+00> : vector<32x128xf32>
    %9 = tpu.matmul %8, %7, %cst_8 {dimension_numbers = #tpu.dot_dimension_numbers<[1], [0], [0], [1], [0, 0, 1, 1], [], []>} : vector<32x64xf32>, vector<64x128xf32>, vector<32x128xf32> -> vector<32x128xf32>
    %c0_9 = arith.constant 0 : index
    %c0_10 = arith.constant 0 : index
    %10 = vector.load %arg5[%c0_9, %c0_10] : memref<32x1xf32, #tpu.memory_space<vmem>>, vector<32x1xf32>
    %11 = vector.broadcast %10 : vector<32x1xf32> to vector<32x128xf32>
    %12 = arith.addf %9, %11 : vector<32x128xf32>
    %cst_11 = arith.constant 0.000000e+00 : f32
    %13 = vector.broadcast %cst_11 : f32 to vector<32x128xf32>
    %14 = arith.maximumf %12, %13 : vector<32x128xf32>
    %c0_12 = arith.constant 0 : index
    %c0_13 = arith.constant 0 : index
    %15 = vector.load %arg6[%c0_12, %c0_13] : memref<32x1xf32, #tpu.memory_space<vmem>>, vector<32x1xf32>
    %16 = vector.broadcast %15 : vector<32x1xf32> to vector<32x128xf32>
    %17 = arith.mulf %14, %16 : vector<32x128xf32>
    %cst_14 = arith.constant dense<0.000000e+00> : vector<128xf32>
    %18 = vector.multi_reduction <add>, %17, %cst_14 [0] : vector<32x128xf32> to vector<128xf32>
    %19 = vector.shape_cast %18 : vector<128xf32> to vector<1x128xf32>
    %c0_15 = arith.constant 0 : index
    %c0_16 = arith.constant 0 : index
    %20 = vector.load %arg7[%c0_15, %c0_16] : memref<1x1xf32, #tpu.memory_space<vmem>>, vector<1x1xf32>
    %21 = vector.broadcast %20 : vector<1x1xf32> to vector<1x128xf32>
    %22 = arith.addf %19, %21 : vector<1x128xf32>
    %23 = arith.negf %22 : vector<1x128xf32>
    %24 = math.exp %23 : vector<1x128xf32>
    %cst_17 = arith.constant 1.000000e+00 : f32
    %25 = vector.broadcast %cst_17 : f32 to vector<1x128xf32>
    %26 = arith.addf %25, %24 : vector<1x128xf32>
    %27 = arith.divf %25, %26 : vector<1x128xf32>
    %c0_18 = arith.constant 0 : index
    %c0_19 = arith.constant 0 : index
    %28 = vector.load %arg8[%c0_18, %c0_19] : memref<1x128xf32, #tpu.memory_space<vmem>>, vector<1x128xf32>
    tpu.vector_store %arg8[%c0_18, %c0_19], %27 {strides = array<i32>} : memref<1x128xf32, #tpu.memory_space<vmem>>, vector<1x128xf32>,
    return
  }
  func.func @transform_0(%arg0: i32) -> (i32, i32) {
    %c0_i32 = arith.constant 0 : i32
    %c0_i32_0 = arith.constant 0 : i32
    return %c0_i32, %arg0 : i32, i32
  }
  func.func @transform_1(%arg0: i32) -> (i32, i32) {
    %c0_i32 = arith.constant 0 : i32
    %c0_i32_0 = arith.constant 0 : i32
    %c0_i32_1 = arith.constant 0 : i32
    return %c0_i32, %c0_i32_0 : i32, i32
  }
  func.func @transform_2(%arg0: i32) -> (i32, i32) {
    %c0_i32 = arith.constant 0 : i32
    %c0_i32_0 = arith.constant 0 : i32
    %c0_i32_1 = arith.constant 0 : i32
    return %c0_i32, %c0_i32_0 : i32, i32
  }
  func.func @transform_3(%arg0: i32) -> (i32, i32) {
    %c0_i32 = arith.constant 0 : i32
    %c0_i32_0 = arith.constant 0 : i32
    %c0_i32_1 = arith.constant 0 : i32
    return %c0_i32, %c0_i32_0 : i32, i32
  }
  func.func @transform_4(%arg0: i32) -> (i32, i32) {
    %c0_i32 = arith.constant 0 : i32
    %c0_i32_0 = arith.constant 0 : i32
    %c0_i32_1 = arith.constant 0 : i32
    return %c0_i32, %c0_i32_0 : i32, i32
  }
  func.func @transform_5(%arg0: i32) -> (i32, i32) {
    %c0_i32 = arith.constant 0 : i32
    %c0_i32_0 = arith.constant 0 : i32
    %c0_i32_1 = arith.constant 0 : i32
    return %c0_i32, %c0_i32_0 : i32, i32
  }
  func.func @transform_6(%arg0: i32) -> (i32, i32) {
    %c0_i32 = arith.constant 0 : i32
    %c0_i32_0 = arith.constant 0 : i32
    %c0_i32_1 = arith.constant 0 : i32
    return %c0_i32, %c0_i32_0 : i32, i32
  }
  func.func @transform_7(%arg0: i32) -> (i32, i32) {
    %c0_i32 = arith.constant 0 : i32
    %c0_i32_0 = arith.constant 0 : i32
    return %c0_i32, %arg0 : i32, i32
  }
}

</mosaic_0001>

<llo_original>
// kernel: tpu_custom_call.1
$region0: #{tpu_custom_call.1}
  #allocation0 [shape = 'u32[]', space=smem, size = 0x4, offset = 0x4, fixed_abs, tag = 'smem constant byte address 0x4 - core index']
  #allocation1 [shape = 'u32[72,128]{1,0:T(1,128)}', space=vmem, size = 0x9000, scoped, tag = 'internal scratch']
  #allocation2 [shape = 'f32[1,1]{1,0:T(1,128)S(1)}', space=vmem, size = 0x200, scoped, tag = 'scoped memory for tpu_custom_call.1']
  %s0 = inlined_call_operand.vmem [shape: f32[8,128], index: 0, kind: input, shape index: {}]
  %s1 = inlined_call_operand.vmem [shape: f32[64,8], index: 1, kind: input, shape index: {}]
  %s2 = inlined_call_operand.vmem [shape: f32[64,1], index: 2, kind: input, shape index: {}]
  %s3 = inlined_call_operand.vmem [shape: f32[32,64], index: 3, kind: input, shape index: {}]
  %s4 = inlined_call_operand.vmem [shape: f32[32,1], index: 4, kind: input, shape index: {}]
  %s5 = inlined_call_operand.vmem [shape: f32[32,1], index: 5, kind: input, shape index: {}]
  %s6 = inlined_call_operand.<no memory space> [shape: f32[1,1], index: 6, kind: input, shape index: {}]
  %s7 = inlined_call_operand.hbm [shape: f32[1,128], index: 7, kind: output, shape index: {}]
  %s8 = sld [smem:[#allocation0]]
  $region38: #{tpu_custom_call.1} parent=0
    _
  %s10 = ssub.s32 1, %s8
  %s11 = scalar_select 0, %s10, %s8
  %v12 = vstv %s6
  %13 = vst [vmem:[#allocation2] sm:$0x1] %v12
  $region1: #{tpu_custom_call.1} parent=0
    #allocation3 [shape = 'u8[512]{0}', space=vmem, size = 0x400, scoped, tag = 'output window, operand 0, single buffered']
    #allocation4 [shape = 's32[1]{0}', space=sflag, size = 0x4, scoped, tag = 'scoped memory for tpu_custom_call.1']
    %14 = vsyncpa [#allocation4], 0
    // Predicated region
    $region2: #{tpu_custom_call.1} parent=1 // pred_check
      _
    $region3: #{tpu_custom_call.1} parent=1 // pred_check_branch
      %16 = sbr.rel (0) target = $region5
    $region4: #{tpu_custom_call.1} parent=1 // pred_region
      _
    $region5: #{tpu_custom_call.1} parent=1 // pred_fallthru
      _
    // Predicated region
    $region6: #{tpu_custom_call.1} parent=1 // pred_check
      _
    $region7: #{tpu_custom_call.1} parent=1 // pred_check_branch
      %18 = sbr.rel (0) target = $region9
    $region8: #{tpu_custom_call.1} parent=1 // pred_region
      _
    $region9: #{tpu_custom_call.1} parent=1 // pred_fallthru
      _
    // Predicated region
    $region10: #{tpu_custom_call.1} parent=1 // pred_check
      _
    $region11: #{tpu_custom_call.1} parent=1 // pred_check_branch
      %20 = sbr.rel (0) target = $region13
    $region12: #{tpu_custom_call.1} parent=1 // pred_region
      _
    $region13: #{tpu_custom_call.1} parent=1 // pred_fallthru
      _
    // Predicated region
    $region14: #{tpu_custom_call.1} parent=1 // pred_check
      _
    $region15: #{tpu_custom_call.1} parent=1 // pred_check_branch
      %22 = sbr.rel (0) target = $region17
    $region16: #{tpu_custom_call.1} parent=1 // pred_region
      _
    $region17: #{tpu_custom_call.1} parent=1 // pred_fallthru
      _
    // Predicated region
    $region18: #{tpu_custom_call.1} parent=1 // pred_check
      _
    $region19: #{tpu_custom_call.1} parent=1 // pred_check_branch
      %24 = sbr.rel (0) target = $region21
    $region20: #{tpu_custom_call.1} parent=1 // pred_region
      _
    $region21: #{tpu_custom_call.1} parent=1 // pred_fallthru
      _
    // Predicated region
    $region22: #{tpu_custom_call.1} parent=1 // pred_check
      _
    $region23: #{tpu_custom_call.1} parent=1 // pred_check_branch
      %26 = sbr.rel (0) target = $region25
    $region24: #{tpu_custom_call.1} parent=1 // pred_region
      _
    $region25: #{tpu_custom_call.1} parent=1 // pred_fallthru
      _
    // Predicated region
    $region26: #{tpu_custom_call.1} parent=1 // pred_check
      _
    $region27: #{tpu_custom_call.1} parent=1 // pred_check_branch
      %28 = sbr.rel (0) target = $region29
    $region28: #{tpu_custom_call.1} parent=1 // pred_region
      _
    $region29: #{tpu_custom_call.1} parent=1 // pred_fallthru
      _
    %v29 = vld [vmem:[%s0] sm:$0xff]
    %v30 = vld [vmem:[%s1] sm:$0xff]
    %v31 = vld [vmem:[%s1 + $0x8] sm:$0xff]
    %v32 = vld [vmem:[%s1 + $0x10] sm:$0xff]
    %v33 = vld [vmem:[%s1 + $0x18] sm:$0xff]
    %v34 = vld [vmem:[%s1 + $0x20] sm:$0xff]
    %v35 = vld [vmem:[%s1 + $0x28] sm:$0xff]
    %v36 = vld [vmem:[%s1 + $0x30] sm:$0xff]
    %v37 = vld [vmem:[%s1 + $0x38] sm:$0xff]
    %v38 = vld [vmem:[%s2] sm:$0xff]
    %v39 = vld [vmem:[%s2 + $0x8] sm:$0xff]
    %v40 = vld [vmem:[%s2 + $0x10] sm:$0xff]
    %v41 = vld [vmem:[%s2 + $0x18] sm:$0xff]
    %v42 = vld [vmem:[%s2 + $0x20] sm:$0xff]
    %v43 = vld [vmem:[%s2 + $0x28] sm:$0xff]
    %v44 = vld [vmem:[%s2 + $0x30] sm:$0xff]
    %v45 = vld [vmem:[%s2 + $0x38] sm:$0xff]
    %47 = vset.pattern.permute.xlu0 0
    %48 = vperm.xlu0 %47, %v38
    %v49 = vpop.permute.xlu0 %48
    %52 = vset.pattern.permute.xlu0 0
    %53 = vperm.xlu0 %52, %v39
    %v54 = vpop.permute.xlu0 %53
    %57 = vset.pattern.permute.xlu0 0
    %58 = vperm.xlu0 %57, %v40
    %v59 = vpop.permute.xlu0 %58
    %62 = vset.pattern.permute.xlu0 0
    %63 = vperm.xlu0 %62, %v41
    %v64 = vpop.permute.xlu0 %63
    %67 = vset.pattern.permute.xlu0 0
    %68 = vperm.xlu0 %67, %v42
    %v69 = vpop.permute.xlu0 %68
    %72 = vset.pattern.permute.xlu0 0
    %73 = vperm.xlu0 %72, %v43
    %v74 = vpop.permute.xlu0 %73
    %77 = vset.pattern.permute.xlu0 0
    %78 = vperm.xlu0 %77, %v44
    %v79 = vpop.permute.xlu0 %78
    %82 = vset.pattern.permute.xlu0 0
    %83 = vperm.xlu0 %82, %v45
    %v84 = vpop.permute.xlu0 %83
    %vm86 = vcmask 64512
    %v88 = vsel %vm86, %v30, 0
    %v91 = vsel %vm86, %v31, 0
    %v94 = vsel %vm86, %v32, 0
    %v97 = vsel %vm86, %v33, 0
    %v100 = vsel %vm86, %v34, 0
    %v103 = vsel %vm86, %v35, 0
    %v106 = vsel %vm86, %v36, 0
    %v109 = vsel %vm86, %v37, 0
    %111 = vmatpush.msra.mxu0 0.0
    %112 = vmatpush.msra.mxu0 0.0
    %113 = vmatpush.msra.mxu0 0.0
    %114 = vmatpush.msra.mxu0 0.0
    %115 = vmatpush.msra.mxu0 0.0
    %116 = vmatpush.msra.mxu0 0.0
    %117 = vmatpush.msra.mxu0 0.0
    %118 = vmatpush.msra.mxu0 0.0
    %119 = vmatpush.msra.mxu0 0.0
    %120 = vmatpush.msra.mxu0 0.0
    %121 = vmatpush.msra.mxu0 0.0
    %122 = vmatpush.msra.mxu0 0.0
    %123 = vmatpush.msra.mxu0 0.0
    %124 = vmatpush.msra.mxu0 0.0
    %125 = vmatpush.msra.mxu0 0.0
    %126 = vmatpush.msra.mxu0 %v29
    %127 = vmatmul.f32.gmra.mxu0 %v88
    %v128 = vpop.f32.mrf.mxu0
    %v129 = vadd.f32 %v49, %v128
    %130 = vmatmul.f32.gmra.mxu0 %v91
    %v131 = vpop.f32.mrf.mxu0
    %v132 = vadd.f32 %v54, %v131
    %133 = vmatmul.f32.gmra.mxu0 %v94
    %v134 = vpop.f32.mrf.mxu0
    %v135 = vadd.f32 %v59, %v134
    %136 = vmatmul.f32.gmra.mxu0 %v97
    %v137 = vpop.f32.mrf.mxu0
    %v138 = vadd.f32 %v64, %v137
    %139 = vmatmul.f32.gmra.mxu0 %v100
    %v140 = vpop.f32.mrf.mxu0
    %v141 = vadd.f32 %v69, %v140
    %142 = vmatmul.f32.gmra.mxu0 %v103
    %v143 = vpop.f32.mrf.mxu0
    %v144 = vadd.f32 %v74, %v143
    %145 = vmatmul.f32.gmra.mxu0 %v106
    %v146 = vpop.f32.mrf.mxu0
    %v147 = vadd.f32 %v79, %v146
    %148 = vmatmul.f32.gmra.mxu0 %v109
    %v149 = vpop.f32.mrf.mxu0
    %v150 = vadd.f32 %v84, %v149
    %151 = vdwg.mxu0
    %v152 = vmax.f32 %v129, 0.0
    %v153 = vmax.f32 %v132, 0.0
    %v154 = vmax.f32 %v135, 0.0
    %v155 = vmax.f32 %v138, 0.0
    %v156 = vmax.f32 %v141, 0.0
    %v157 = vmax.f32 %v144, 0.0
    %v158 = vmax.f32 %v147, 0.0
    %v159 = vmax.f32 %v150, 0.0
    %v160 = vld [vmem:[%s3] sm:$0xff]
    %v161 = vld [vmem:[%s3 + $0x8] sm:$0xff]
    %v162 = vld [vmem:[%s3 + $0x10] sm:$0xff]
    %v163 = vld [vmem:[%s3 + $0x18] sm:$0xff]
    %v164 = vld [vmem:[%s4] sm:$0xff]
    %v165 = vld [vmem:[%s4 + $0x8] sm:$0xff]
    %v166 = vld [vmem:[%s4 + $0x10] sm:$0xff]
    %v167 = vld [vmem:[%s4 + $0x18] sm:$0xff]
    %169 = vset.pattern.permute.xlu0 0
    %170 = vperm.xlu0 %169, %v164
    %v171 = vpop.permute.xlu0 %170
    %174 = vset.pattern.permute.xlu0 0
    %175 = vperm.xlu0 %174, %v165
    %v176 = vpop.permute.xlu0 %175
    %179 = vset.pattern.permute.xlu0 0
    %180 = vperm.xlu0 %179, %v166
    %v181 = vpop.permute.xlu0 %180
    %184 = vset.pattern.permute.xlu0 0
    %185 = vperm.xlu0 %184, %v167
    %v186 = vpop.permute.xlu0 %185
    %vm188 = vcmask 523264
    %v190 = vsel %vm188, %v160, 0
    %v193 = vsel %vm188, %v161, 0
    %v196 = vsel %vm188, %v162, 0
    %v199 = vsel %vm188, %v163, 0
    %201 = vmatpush.msra.mxu0 0.0
    %202 = vmatpush.msra.mxu0 0.0
    %203 = vmatpush.msra.mxu0 0.0
    %204 = vmatpush.msra.mxu0 0.0
    %205 = vmatpush.msra.mxu0 0.0
    %206 = vmatpush.msra.mxu0 0.0
    %207 = vmatpush.msra.mxu0 0.0
    %208 = vmatpush.msra.mxu0 0.0
    %209 = vmatpush.msra.mxu0 %v159
    %210 = vmatpush.msra.mxu0 %v158
    %211 = vmatpush.msra.mxu0 %v157
    %212 = vmatpush.msra.mxu0 %v156
    %213 = vmatpush.msra.mxu0 %v155
    %214 = vmatpush.msra.mxu0 %v154
    %215 = vmatpush.msra.mxu0 %v153
    %216 = vmatpush.msra.mxu0 %v152
    %217 = vmatmul.f32.gmra.mxu0 %v190
    %v218 = vpop.f32.mrf.mxu0
    %v219 = vadd.f32 %v171, %v218
    %220 = vmatmul.f32.gmra.mxu0 %v193
    %v221 = vpop.f32.mrf.mxu0
    %v222 = vadd.f32 %v176, %v221
    %223 = vmatmul.f32.gmra.mxu0 %v196
    %v224 = vpop.f32.mrf.mxu0
    %v225 = vadd.f32 %v181, %v224
    %226 = vmatmul.f32.gmra.mxu0 %v199
    %v227 = vpop.f32.mrf.mxu0
    %v228 = vadd.f32 %v186, %v227
    %229 = vdwg.mxu0
    %v230 = vmax.f32 %v219, 0.0
    %v231 = vmax.f32 %v222, 0.0
    %v232 = vmax.f32 %v225, 0.0
    %v233 = vmax.f32 %v228, 0.0
    %v234 = vld [vmem:[%s5] sm:$0xff]
    %v235 = vld [vmem:[%s5 + $0x8] sm:$0xff]
    %v236 = vld [vmem:[%s5 + $0x10] sm:$0xff]
    %v237 = vld [vmem:[%s5 + $0x18] sm:$0xff]
    %239 = vset.pattern.permute.xlu0 0
    %240 = vperm.xlu0 %239, %v234
    %v241 = vpop.permute.xlu0 %240
    %244 = vset.pattern.permute.xlu0 0
    %245 = vperm.xlu0 %244, %v235
    %v246 = vpop.permute.xlu0 %245
    %249 = vset.pattern.permute.xlu0 0
    %250 = vperm.xlu0 %249, %v236
    %v251 = vpop.permute.xlu0 %250
    %254 = vset.pattern.permute.xlu0 0
    %255 = vperm.xlu0 %254, %v237
    %v256 = vpop.permute.xlu0 %255
    %v258 = vmul.f32 %v230, %v241
    %v259 = vmul.f32 %v231, %v246
    %v260 = vmul.f32 %v232, %v251
    %v261 = vmul.f32 %v233, %v256
    %v262 = vadd.f32 %v258, %v259
    %v263 = vadd.f32 %v262, %v260
    %v264 = vadd.f32 %v263, %v261
    %v265 = vrot.slane %v264, 4
    %v266 = vadd.f32 %v264, %v265
    %v267 = vrot.slane %v266, 2
    %v268 = vadd.f32 %v266, %v267
    %v269 = vrot.slane %v268, 1
    %v270 = vadd.f32 %v268, %v269
    %v271 = vld [vmem:[#allocation2] sm:$0x1]
    %273 = vset.pattern.permute.xlu0 0
    %274 = vperm.xlu0 %273, %v271
    %v275 = vpop.permute.xlu0 %274
    %v277 = vperm.slane %v275, 0
    %v278 = vadd.f32 %v270, %v277
    %v279 = vxor.u32 %v278, 2147483648
    %v280 = vmul.f32 %v279, 1.442695
    %v281 = vpow.pop %v280
    %v282 = vadd.f32 %v281, 1.0
    %v283 = vrcp.pop %v282
    %v284 = vmul.f32 %v282, %v283
    %v285 = vsub.f32 1.0, %v284
    %v286 = vmul.f32 %v283, %v285
    %v287 = vadd.f32 %v283, %v286
    %vm288 = vweird.f32 %v282
    %vm289 = vweird.f32 %v283
    %vm290 = vmor %vm288, %vm289
    %v291 = vsel %vm290, %v283, %v287
    %v292 = vand.u32 2147483647, %v282
    %vm293 = vcmp.eq.f32.partialorder %v292, 8.507059e+37
    %v294 = vand.u32 %v282, 2147483648
    %v295 = vor.u32 1.1754944e-38, %v294
    %v296 = vsel %vm293, %v295, %v291
    %v297 = vmul.f32 1.0, %v296
    %298 = vst [vmem:[#allocation3] sm:$0x1] %v297
    // Predicated region
    $region30: #{tpu_custom_call.1} parent=1 // pred_check
      _
    $region31: #{tpu_custom_call.1} parent=1 // pred_check_branch
      %300 = sbr.rel (0) target = $region33
    $region32: #{tpu_custom_call.1} parent=1 // pred_region
      %302 = vsyncadd [#allocation4], 0
      %s304 = sshll.u32 [#allocation3], 4
      %s305 = int_to_ptr.vmem [resolvable:$true] %s304
      %s306 = sshll.u32 %s7, 4
      %s307 = int_to_ptr.hbm [resolvable:$true] %s306
      %309 = dma.vmem_to_hbm [thread:$0]  %s305, 16, %s307, [#allocation4]
    $region33: #{tpu_custom_call.1} parent=1 // pred_fallthru
      _
    // Predicated region
    $region34: #{tpu_custom_call.1} parent=1 // pred_check
      _
    $region35: #{tpu_custom_call.1} parent=1 // pred_check_branch
      %311 = sbr.rel (0) target = $region37
    $region36: #{tpu_custom_call.1} parent=1 // pred_region
      %313 = dma.done [#allocation4], 16
    $region37: #{tpu_custom_call.1} parent=1 // pred_fallthru
      _
    %314 = vsyncpa [#allocation4], 1

</llo_original>
